<compile_context>
chip_gen: v7x
topology: tpu7x:2x2x1
jax: 0.10.0
libtpu: 0.0.40
codegen_flags: <defaults>
</compile_context>

<pallas_src>
import functools
import math

import jax
import jax.numpy as jnp
from jax.experimental import pallas as pl
from jax.experimental.pallas import tpu as pltpu


def _xgcn_kernel(x_ref, adj_ref, w_ref, o_ref, *, mxu_dtype):
    # x_ref:   (Bblk, N, F_in)   node features, stored dtype (e.g. f32)
    # adj_ref: (Bblk, N, N)      adjacency, stored dtype
    # w_ref:   (F_in, F_out)     shared weight
    # o_ref:   (Bblk, N, F_out)  output
    # First matmul: cast operands to bf16 in-register (MXU-native), f32 accum.
    x = x_ref[...].astype(mxu_dtype)
    w = w_ref[...].astype(mxu_dtype)
    support = jnp.einsum("bnf,fo->bno", x, w,
                         preferred_element_type=jnp.float32)
    support = jnp.maximum(support, 0.0)

    # Second matmul kept in f32: adj arrives at its stored precision, support
    # stays f32.  Kernel is memory-bound, so the extra MXU passes are hidden.
    adj_f32 = adj_ref[...].astype(jnp.float32)
    out = jnp.einsum("bij,bjf->bif", adj_f32, support,
                     preferred_element_type=jnp.float32)
    o_ref[...] = out.astype(o_ref.dtype)


def xgraph_convolution(x, adj, weight, *, mxu_dtype=jnp.bfloat16,
                       out_dtype=None, batch_block=None):
    """x: (B, N, F_in), adj: (B, N, N), weight: (F_in, F_out) -> (B, N, F_out)."""
    B, N, F_in = x.shape
    F_out = weight.shape[1]
    assert adj.shape == (B, N, N)
    assert weight.shape == (F_in, F_out)
    if out_dtype is None:
        out_dtype = x.dtype

    x_isz = jnp.dtype(x.dtype).itemsize
    adj_isz = jnp.dtype(adj.dtype).itemsize
    w_isz = jnp.dtype(weight.dtype).itemsize
    out_isz = jnp.dtype(out_dtype).itemsize
    mxu_isz = jnp.dtype(mxu_dtype).itemsize

    # Per-generation VMEM capacity (v5e/v6e 128 MiB, v7x 64 MiB per TC).
    try:
        vmem_cap = int(pltpu.get_tpu_info().vmem_capacity_bytes)
    except Exception:  # non-TPU / interpret fallback: assume the smallest part
        vmem_cap = 64 * 1024 * 1024

    def per_step_bytes(bb):
        # Double-buffered input/output blocks at their *real* dtypes ...
        io = 2 * bb * N * (F_in * x_isz + N * adj_isz + F_out * out_isz)
        # ... plus the (double-buffered) weight block ...
        w_blk = 2 * F_in * F_out * w_isz
        # ... plus in-kernel bf16 casts and the two f32 intermediates.
        interm = (bb * N * (F_in * mxu_isz + 2 * F_out * 4)
                  + F_in * F_out * mxu_isz)
        return io + w_blk + interm

    # Block-size budget: 24 MiB on 128-MiB parts, ~16 MiB on v7x.
    budget = min(24 * 1024 * 1024, vmem_cap // 4)

    if batch_block is None:
        # >=2 grid steps whenever B >= 2 (shards the "parallel" axis across
        # v7x's two TensorCores and enables DMA/compute overlap); prefer >=4
        # steps when B allows it — per-step overhead is only ~0.35 us.
        batch_block = max(1, B // 4) if B >= 4 else max(1, B // 2)
        while batch_block > 1 and per_step_bytes(batch_block) > budget:
            batch_block //= 2
    batch_block = max(1, min(int(batch_block), B))
    # Keep the grid exact (no batch padding, no wrapper copies): shrink to a
    # divisor of B.  batch_block == 1 always divides.
    while B % batch_block != 0:
        batch_block -= 1
    n_steps = B // batch_block

    psb = per_step_bytes(batch_block)
    # TODO(synk): if even batch_block == 1 overflows (huge N), the adj N-tiling
    # described at the top of the file is required instead of a bigger limit.
    vmem_limit = int(min(0.75 * vmem_cap,
                         max(int(1.5 * psb), 32 * 1024 * 1024)))

    flops = 2 * B * N * F_in * F_out + 2 * B * N * N * F_out
    bytes_accessed = (x.size * x_isz + adj.size * adj_isz
                      + weight.size * w_isz + B * N * F_out * out_isz)
    cost = pl.CostEstimate(flops=flops, transcendentals=0,
                           bytes_accessed=bytes_accessed)

    kernel = functools.partial(_xgcn_kernel, mxu_dtype=mxu_dtype)

    return pl.pallas_call(
        kernel,
        out_shape=jax.ShapeDtypeStruct((B, N, F_out), out_dtype),
        grid_spec=pltpu.PrefetchScalarGridSpec(
            num_scalar_prefetch=0,
            grid=(n_steps,),
            in_specs=[
                pl.BlockSpec((batch_block, N, F_in), lambda b: (b, 0, 0)),
                pl.BlockSpec((batch_block, N, N), lambda b: (b, 0, 0)),
                pl.BlockSpec((F_in, F_out), lambda b: (0, 0)),
            ],
            out_specs=pl.BlockSpec((batch_block, N, F_out),
                                   lambda b: (b, 0, 0)),
        ),
        compiler_params=pltpu.CompilerParams(
            dimension_semantics=("parallel",),
            vmem_limit_bytes=vmem_limit),
        cost_estimate=cost,
    )(x, adj, weight)


def xgcn_reference(x, adj, weight, mxu_dtype=None):
    """Pure-JAX reference mirroring the PyTorch forward.

    If mxu_dtype is given, mirrors the kernel's cast points exactly (bf16
    operands in the first matmul, f32 accumulation, f32 adjacency matmul)."""
    if mxu_dtype is not None:
        xk = x.astype(mxu_dtype)
        wk = weight.astype(mxu_dtype)
    else:
        xk, wk = x, weight
    support = jnp.maximum(
        jnp.einsum("bnf,fo->bno", xk, wk, preferred_element_type=jnp.float32),
        0.0)
    return jnp.einsum("bij,bjf->bif", adj.astype(jnp.float32), support,
                      preferred_element_type=jnp.float32)


if __name__ == "__main__":
    # Small shapes consistent with the module's forward:
    # batch B=2, nodes N=16, features_in=32, features_out=32
    B, N, F_in, F_out = 2, 16, 32, 32

    key = jax.random.PRNGKey(0)
    k_x, k_adj, k_w = jax.random.split(key, 3)

    x = jax.random.normal(k_x, (B, N, F_in), dtype=jnp.float32)
    adj = jax.random.uniform(k_adj, (B, N, N), dtype=jnp.float32)

    # Deterministic parameter init matching reset_parameters():
    # uniform(-stdv, stdv) with stdv = 1/sqrt(features_out)
    stdv = 1.0 / math.sqrt(F_out)
    weight = jax.random.uniform(
        k_w, (F_in, F_out), dtype=jnp.float32, minval=-stdv, maxval=stdv
    )

    out = xgraph_convolution(x, adj, weight)
    out = jax.block_until_ready(out)
    assert out.shape == (B, N, F_out)
    assert out.dtype == x.dtype

    # Tight check against a reference with identical cast points (bf16 first
    # matmul operands, f32 accumulation, f32 adjacency matmul).
    ref_mirror = xgcn_reference(x, adj, weight, mxu_dtype=jnp.bfloat16)
    assert jnp.allclose(out.astype(jnp.float32), ref_mirror.astype(jnp.float32),
                        atol=1e-2, rtol=1e-2), "Mismatch vs bf16-mirrored reference"

    # Loose semantic check against the pure-f32 reference (bf16 rounding of the
    # first matmul operands is the only difference).
    ref_f32 = xgcn_reference(x, adj, weight)
    assert jnp.allclose(out.astype(jnp.float32), ref_f32,
                        atol=5e-2, rtol=5e-2), "Mismatch vs f32 reference"

    print("KERNEL_OK")
</pallas_src>

<mosaic_0001>
module attributes {stable_mosaic.version = 11 : i64} {
  func.func @_xgcn_kernel(%arg0: i32, %arg1: memref<1x16x32xf32, #tpu.memory_space<vmem>>, %arg2: memref<1x16x16xf32, #tpu.memory_space<vmem>>, %arg3: memref<32x32xf32, #tpu.memory_space<vmem>>, %arg4: memref<1x16x32xf32, #tpu.memory_space<vmem>>) attributes {dimension_semantics = [#tpu.dimension_semantics<parallel>], iteration_bounds = array<i64: 2>, scalar_prefetch = 0 : i64, scratch_operands = 0 : i64, tpu.core_type = #tpu.core_type<tc>, window_params = [{transform_indices = @transform_0, window_bounds = array<i64: 1, 16, 32>}, {transform_indices = @transform_1, window_bounds = array<i64: 1, 16, 16>}, {pipeline_mode = #tpu.pipeline_mode<synchronous>, transform_indices = @transform_2, window_bounds = array<i64: 32, 32>}, {transform_indices = @transform_3, window_bounds = array<i64: 1, 16, 32>}]} {
    %c0 = arith.constant 0 : index
    %c0_0 = arith.constant 0 : index
    %c0_1 = arith.constant 0 : index
    %0 = vector.load %arg1[%c0, %c0_0, %c0_1] : memref<1x16x32xf32, #tpu.memory_space<vmem>>, vector<1x16x32xf32>
    %1 = arith.truncf %0 : vector<1x16x32xf32> to vector<1x16x32xbf16>
    %c0_2 = arith.constant 0 : index
    %c0_3 = arith.constant 0 : index
    %2 = vector.load %arg3[%c0_2, %c0_3] : memref<32x32xf32, #tpu.memory_space<vmem>>, vector<32x32xf32>
    %3 = arith.truncf %2 : vector<32x32xf32> to vector<32x32xbf16>
    "tpu.trace_start"() <{level = 10 : i32, message = "bnf,fo->bno"}> : () -> ()
    %cst = arith.constant dense<0.000000e+00> : vector<1x16x32xf32>
    %4 = tpu.matmul %1, %3, %cst {dimension_numbers = #tpu.dot_dimension_numbers<[2], [0], [0, 1], [1], [0, 0, 0, 1, 1, 1], [], []>} : vector<1x16x32xbf16>, vector<32x32xbf16>, vector<1x16x32xf32> -> vector<1x16x32xf32>
    "tpu.trace_stop"() : () -> ()
    %cst_4 = arith.constant 0.000000e+00 : f32
    %5 = vector.broadcast %cst_4 : f32 to vector<1x16x32xf32>
    %6 = arith.maximumf %4, %5 : vector<1x16x32xf32>
    %c0_5 = arith.constant 0 : index
    %c0_6 = arith.constant 0 : index
    %c0_7 = arith.constant 0 : index
    %7 = vector.load %arg2[%c0_5, %c0_6, %c0_7] : memref<1x16x16xf32, #tpu.memory_space<vmem>>, vector<1x16x16xf32>
    "tpu.trace_start"() <{level = 10 : i32, message = "bij,bjf->bif"}> : () -> ()
    %cst_8 = arith.constant dense<0.000000e+00> : vector<1x16x32xf32>
    %8 = tpu.matmul %7, %6, %cst_8 {dimension_numbers = #tpu.dot_dimension_numbers<[2], [1], [1], [2], [0, 0, 0, 1, 1, 2], [0], [0]>} : vector<1x16x16xf32>, vector<1x16x32xf32>, vector<1x16x32xf32> -> vector<1x16x32xf32>
    "tpu.trace_stop"() : () -> ()
    %c0_9 = arith.constant 0 : index
    %c0_10 = arith.constant 0 : index
    %c0_11 = arith.constant 0 : index
    %9 = vector.load %arg4[%c0_9, %c0_10, %c0_11] : memref<1x16x32xf32, #tpu.memory_space<vmem>>, vector<1x16x32xf32>
    tpu.vector_store %arg4[%c0_9, %c0_10, %c0_11], %8 {strides = array<i32>} : memref<1x16x32xf32, #tpu.memory_space<vmem>>, vector<1x16x32xf32>,
    return
  }
  func.func @transform_0(%arg0: i32) -> (i32, i32, i32) {
    %c0_i32 = arith.constant 0 : i32
    %c0_i32_0 = arith.constant 0 : i32
    %c0_i32_1 = arith.constant 0 : i32
    return %arg0, %c0_i32, %c0_i32_0 : i32, i32, i32
  }
  func.func @transform_1(%arg0: i32) -> (i32, i32, i32) {
    %c0_i32 = arith.constant 0 : i32
    %c0_i32_0 = arith.constant 0 : i32
    %c0_i32_1 = arith.constant 0 : i32
    return %arg0, %c0_i32, %c0_i32_0 : i32, i32, i32
  }
  func.func @transform_2(%arg0: i32) -> (i32, i32) {
    %c0_i32 = arith.constant 0 : i32
    %c0_i32_0 = arith.constant 0 : i32
    %c0_i32_1 = arith.constant 0 : i32
    return %c0_i32, %c0_i32_0 : i32, i32
  }
  func.func @transform_3(%arg0: i32) -> (i32, i32, i32) {
    %c0_i32 = arith.constant 0 : i32
    %c0_i32_0 = arith.constant 0 : i32
    %c0_i32_1 = arith.constant 0 : i32
    return %arg0, %c0_i32, %c0_i32_0 : i32, i32, i32
  }
}

</mosaic_0001>

<llo_original>
// kernel: tpu_custom_call.1
$region0: #{tpu_custom_call.1}
  #allocation0 [shape = 'u32[]', space=smem, size = 0x4, offset = 0x4, fixed_abs, tag = 'smem constant byte address 0x4 - core index']
  #allocation1 [shape = 'u32[144,128]{1,0:T(1,128)}', space=vmem, size = 0x12000, scoped, tag = 'internal scratch']
  %s0 = inlined_call_operand.hbm [shape: f32[2,16,32], index: 0, kind: input, shape index: {}]
  %s1 = inlined_call_operand.hbm [shape: f32[2,16,16], index: 1, kind: input, shape index: {}]
  %s2 = inlined_call_operand.hbm [shape: f32[32,32], index: 2, kind: input, shape index: {}]
  %s3 = inlined_call_operand.hbm [shape: f32[2,16,32], index: 3, kind: output, shape index: {}]
  %s4 = sld [smem:[#allocation0]]
  $region57: #{tpu_custom_call.1} parent=0
    _
  %s6 = ssub.s32 1, %s4
  %s7 = scalar_select 0, %s6, %s4
  $region1: #{tpu_custom_call.1} parent=0
    #allocation2 [shape = 'u8[16384]{0}', space=vmem, size = 0x4000, scoped, tag = 'input window, operand 0']
    #allocation3 [shape = 's32[2]{0}', space=sflag, size = 0x8, scoped, tag = 'scoped memory for tpu_custom_call.1']
    #allocation4 [shape = 's32[2]{0}', space=sflag, size = 0x8, scoped, tag = 'scoped memory for tpu_custom_call.1']
    #allocation5 [shape = 'u8[16384]{0}', space=vmem, size = 0x4000, scoped, tag = 'input window, operand 1']
    #allocation6 [shape = 's32[2]{0}', space=sflag, size = 0x8, scoped, tag = 'scoped memory for tpu_custom_call.1']
    #allocation7 [shape = 'u8[16384]{0}', space=vmem, size = 0x4000, scoped, tag = 'input window, operand 2, single buffered']
    #allocation8 [shape = 'u8[16384]{0}', space=vmem, size = 0x4000, scoped, tag = 'output window, operand 0']
    %8 = vsyncpa [#allocation3], 0
    %s9 = scalar_lea.sflag [#allocation3], 1
    %10 = vsyncpa %s9, 0
    %11 = vsyncpa [#allocation6], 0
    %s12 = scalar_lea.sflag [#allocation6], 1
    %13 = vsyncpa %s12, 0
    %14 = vsyncpa [#allocation4], 0
    %s15 = scalar_lea.sflag [#allocation4], 1
    %16 = vsyncpa %s15, 0
    loop: start=0, step=1, limit=4
    $region2: #{tpu_custom_call.1} parent=1 // loop_pre_header
      _
    $region3: #{tpu_custom_call.1} parent=1 // loop_header
      %s18 = sphi 0, %s22
      %p19 = scmp.ge.s32.totalorder %s18, 4
      %s28 = sphi 0, %s30
      %s31 = sphi 0, %s28
      %s32 = sphi 0, %s31
      %s48 = sphi 0, %s32
      %s54 = sphi 0, %s56
      %s57 = sphi 0, %s54
      %s58 = sphi 0, %s57
      %s74 = sphi 0, %s58
      %s78 = sphi 0, %s78
      %s80 = sphi 0, %s78
      %s81 = sphi 0, %s80
      %s95 = sphi 0, %s81
      %s101 = sphi 0, %s103
      %s104 = sphi 0, %s101
      %s105 = sphi 0, %s104
      %s121 = sphi 0, %s105
    $region4: #{tpu_custom_call.1} parent=1 // loop_header_branch
      %21 = sbr.rel (%p19) target = $region8
    $region5: #{tpu_custom_call.1} parent=1 // loop_body
      %s23 = ssub.s32 %s18, 1
      %s24 = ssub.s32 %s18, 2
      %s25 = sadd.s32 %s18, 1
      %s26 = ssub.s32 %s18, %s25
      %p27 = scmp.eq.s32.totalorder %s26, 0
      %s29 = sadd.s32 %s28, 1
      %s30 = scalar_select %p27, %s28, %s29
      %p33 = pneg %p27
      %p34 = scmp.eq.s32.totalorder %s18, 1
      %p35 = por %p33, %p34
      %p36 = scmp.ne.s32.totalorder %s28, %s31
      %p37 = scmp.eq.s32.totalorder %s18, 0
      %p38 = por %p36, %p37
      %p39 = scmp.ne.s32.totalorder %s28, %s31
      %p40 = scmp.eq.s32.totalorder %s23, 1
      %p41 = por %p39, %p40
      %p42 = scmp.ne.s32.totalorder %s31, %s32
      %p43 = scmp.eq.s32.totalorder %s23, 0
      %p44 = por %p42, %p43
      %p45 = scmp.ne.s32.totalorder %s31, %s32
      %p46 = scmp.eq.s32.totalorder %s24, 1
      %p47 = por %p45, %p46
      %p49 = scmp.ne.s32.totalorder %s32, %s48
      %p50 = scmp.eq.s32.totalorder %s24, 0
      %p51 = por %p49, %p50
      %s52 = ssub.s32 %s18, %s25
      %p53 = scmp.eq.s32.totalorder %s52, 0
      %s55 = sadd.s32 %s54, 1
      %s56 = scalar_select %p53, %s54, %s55
      %p59 = pneg %p53
      %p60 = scmp.eq.s32.totalorder %s18, 1
      %p61 = por %p59, %p60
      %p62 = scmp.ne.s32.totalorder %s54, %s57
      %p63 = scmp.eq.s32.totalorder %s18, 0
      %p64 = por %p62, %p63
      %p65 = scmp.ne.s32.totalorder %s54, %s57
      %p66 = scmp.eq.s32.totalorder %s23, 1
      %p67 = por %p65, %p66
      %p68 = scmp.ne.s32.totalorder %s57, %s58
      %p69 = scmp.eq.s32.totalorder %s23, 0
      %p70 = por %p68, %p69
      %p71 = scmp.ne.s32.totalorder %s57, %s58
      %p72 = scmp.eq.s32.totalorder %s24, 1
      %p73 = por %p71, %p72
      %p75 = scmp.ne.s32.totalorder %s58, %s74
      %p76 = scmp.eq.s32.totalorder %s24, 0
      %p77 = por %p75, %p76
      %s79 = sadd.s32 %s78, 1
      %p82 = scmp.eq.s32.totalorder %s18, 1
      %p83 = scmp.ne.s32.totalorder %s78, %s80
      %p84 = scmp.eq.s32.totalorder %s18, 0
      %p85 = por %p83, %p84
      %p86 = scmp.ne.s32.totalorder %s78, %s80
      %p87 = scmp.eq.s32.totalorder %s23, 1
      %p88 = por %p86, %p87
      %p89 = scmp.ne.s32.totalorder %s80, %s81
      %p90 = scmp.eq.s32.totalorder %s23, 0
      %p91 = por %p89, %p90
      %p92 = scmp.ne.s32.totalorder %s80, %s81
      %p93 = scmp.eq.s32.totalorder %s24, 1
      %p94 = por %p92, %p93
      %p96 = scmp.ne.s32.totalorder %s81, %s95
      %p97 = scmp.eq.s32.totalorder %s24, 0
      %p98 = por %p96, %p97
      %s99 = ssub.s32 %s18, %s25
      %p100 = scmp.eq.s32.totalorder %s99, 0
      %s102 = sadd.s32 %s101, 1
      %s103 = scalar_select %p100, %s101, %s102
      %p106 = pneg %p100
      %p107 = scmp.eq.s32.totalorder %s18, 1
      %p108 = por %p106, %p107
      %p109 = scmp.ne.s32.totalorder %s101, %s104
      %p110 = scmp.eq.s32.totalorder %s18, 0
      %p111 = por %p109, %p110
      %p112 = scmp.ne.s32.totalorder %s101, %s104
      %p113 = scmp.eq.s32.totalorder %s23, 1
      %p114 = por %p112, %p113
      %p115 = scmp.ne.s32.totalorder %s104, %s105
      %p116 = scmp.eq.s32.totalorder %s23, 0
      %p117 = por %p115, %p116
      %p118 = scmp.ne.s32.totalorder %s104, %s105
      %p119 = scmp.eq.s32.totalorder %s24, 1
      %p120 = por %p118, %p119
      %p122 = scmp.ne.s32.totalorder %s105, %s121
      %p123 = scmp.eq.s32.totalorder %s24, 0
      %p124 = por %p122, %p123
      %p125 = scmp.le.s32.totalorder 1, %s18
      %p126 = scmp.lt.s32.totalorder %s18, 3
      %p127 = pnand %p125, %p126
      %p128 = pneg %p127
      // Predicated region
      $region9: #{tpu_custom_call.1} parent=5 // pred_check
        _
      $region10: #{tpu_custom_call.1} parent=5 // pred_check_branch
        %130 = sbr.rel (%p127) target = $region12
      $region11: #{tpu_custom_call.1} parent=5 // pred_region
        %s131 = ssub.s32 %s18, 1
        // Predicated region
        $region13: #{tpu_custom_call.1} parent=11 // pred_check
          %p132 = pneg %p91
        $region14: #{tpu_custom_call.1} parent=11 // pred_check_branch
          %134 = sbr.rel (%p132) target = $region16
        $region15: #{tpu_custom_call.1} parent=11 // pred_region
          %s136 = ssub.s32 512, 512
          %137 = vsyncadd [#allocation6], %s136
          %s138 = sshll.u32 [#allocation7], 4
          %s139 = int_to_ptr.vmem [resolvable:$true] %s138
          %144 = dma.hbm_to_vmem [thread:$0]  %s2, 512, %s139, [#allocation6], 128, 128, 8
        $region16: #{tpu_custom_call.1} parent=11 // pred_fallthru
          _
      $region12: #{tpu_custom_call.1} parent=5 // pred_fallthru
        _
      %p145 = scmp.lt.s32.totalorder %s18, 2
      // Predicated region
      $region17: #{tpu_custom_call.1} parent=5 // pred_check
        %p146 = pneg %p145
      $region18: #{tpu_custom_call.1} parent=5 // pred_check_branch
        %148 = sbr.rel (%p146) target = $region20
      $region19: #{tpu_custom_call.1} parent=5 // pred_region
        // Predicated region
        $region21: #{tpu_custom_call.1} parent=19 // pred_check
          %p149 = pneg %p38
        $region22: #{tpu_custom_call.1} parent=19 // pred_check_branch
          %151 = sbr.rel (%p149) target = $region24
        $region23: #{tpu_custom_call.1} parent=19 // pred_region
          %s152 = sand.u32 %s28, 1
          %s153 = scalar_lea.sflag [#allocation3], %s152
          %s154 = sand.u32 %s28, 1
          %s155 = smul.addr %s154, 16
          %s156 = scalar_lea.vmem [#allocation2], %s155
          %s158 = ssub.s32 256, 256
          %159 = vsyncadd %s153, %s158
          %s160 = smul.addr %s18, 2
          %s161 = smul.addr %s160, 128
          %s162 = scalar_lea.hbm %s0, %s161
          %s163 = sshll.u32 %s156, 4
          %s164 = int_to_ptr.vmem [resolvable:$true] %s163
          %169 = dma.hbm_to_vmem [thread:$0]  %s162, 256, %s164, %s153, 128, 128, 8
        $region24: #{tpu_custom_call.1} parent=19 // pred_fallthru
          _
        // Predicated region
        $region25: #{tpu_custom_call.1} parent=19 // pred_check
          %p170 = pneg %p64
        $region26: #{tpu_custom_call.1} parent=19 // pred_check_branch
          %172 = sbr.rel (%p170) target = $region28
        $region27: #{tpu_custom_call.1} parent=19 // pred_region
          %s173 = sand.u32 %s18, 1
          %s174 = scalar_lea.sflag [#allocation6], %s173
          %s175 = sand.u32 %s54, 1
          %s176 = smul.addr %s175, 16
          %s177 = scalar_lea.vmem [#allocation5], %s176
          %s179 = ssub.s32 256, 256
          %180 = vsyncadd %s174, %s179
          %s181 = smul.addr %s18, 2
          %s182 = smul.addr %s181, 128
          %s183 = scalar_lea.hbm %s1, %s182
          %s184 = sshll.u32 %s177, 4
          %s185 = int_to_ptr.vmem [resolvable:$true] %s184
          %190 = dma.hbm_to_vmem [thread:$0]  %s183, 256, %s185, %s174, 128, 128, 8
        $region28: #{tpu_custom_call.1} parent=19 // pred_fallthru
          _
      $region20: #{tpu_custom_call.1} parent=5 // pred_fallthru
        _
      %p191 = scmp.le.s32.totalorder 1, %s18
      %p192 = scmp.lt.s32.totalorder %s18, 3
      %p193 = pnand %p191, %p192
      %p194 = pneg %p193
      // Predicated region
      $region29: #{tpu_custom_call.1} parent=5 // pred_check
        _
      $region30: #{tpu_custom_call.1} parent=5 // pred_check_branch
        %196 = sbr.rel (%p193) target = $region32
      $region31: #{tpu_custom_call.1} parent=5 // pred_region
        %s197 = ssub.s32 %s18, 1
        %s198 = sand.u32 %s31, 1
        %s199 = scalar_lea.sflag [#allocation3], %s198
        %s200 = sand.u32 %s31, 1
        %s201 = smul.addr %s200, 16
        %s202 = scalar_lea.vmem [#allocation2], %s201
        // Predicated region
        $region33: #{tpu_custom_call.1} parent=31 // pred_check
          %p203 = pneg %p44
        $region34: #{tpu_custom_call.1} parent=31 // pred_check_branch
          %205 = sbr.rel (%p203) target = $region36
        $region35: #{tpu_custom_call.1} parent=31 // pred_region
          %206 = dma.done %s199, 256
        $region36: #{tpu_custom_call.1} parent=31 // pred_fallthru
          _
        %s207 = sand.u32 %s23, 1
        %s208 = scalar_lea.sflag [#allocation6], %s207
        %s209 = sand.u32 %s57, 1
        %s210 = smul.addr %s209, 16
        %s211 = scalar_lea.vmem [#allocation5], %s210
        // Predicated region
        $region37: #{tpu_custom_call.1} parent=31 // pred_check
          %p212 = pneg %p70
        $region38: #{tpu_custom_call.1} parent=31 // pred_check_branch
          %214 = sbr.rel (%p212) target = $region40
        $region39: #{tpu_custom_call.1} parent=31 // pred_region
          %215 = dma.done %s208, 256
        $region40: #{tpu_custom_call.1} parent=31 // pred_fallthru
          _
        // Predicated region
        $region41: #{tpu_custom_call.1} parent=31 // pred_check
          %p216 = pneg %p91
        $region42: #{tpu_custom_call.1} parent=31 // pred_check_branch
          %218 = sbr.rel (%p216) target = $region44
        $region43: #{tpu_custom_call.1} parent=31 // pred_region
          %219 = dma.done [#allocation6], 512
        $region44: #{tpu_custom_call.1} parent=31 // pred_fallthru
          _
        %s220 = sand.u32 %s31, 1
        %s221 = scalar_lea.sflag [#allocation3], %s220
        %s222 = sand.u32 %s31, 1
        %s223 = smul.addr %s222, 16
        %s224 = scalar_lea.vmem [#allocation2], %s223
        %p225 = pneg %p44
        %p226 = pneg %p41
        %s227 = sand.u32 %s23, 1
        %s228 = scalar_lea.sflag [#allocation6], %s227
        %s229 = sand.u32 %s57, 1
        %s230 = smul.addr %s229, 16
        %s231 = scalar_lea.vmem [#allocation5], %s230
        %p232 = pneg %p70
        %p233 = pneg %p67
        %p234 = pneg %p91
        %p235 = pneg %p88
        %p236 = pneg %p117
        %p237 = pneg %p114
        %s238 = sand.u32 %s104, 1
        %s239 = scalar_lea.sflag [#allocation4], %s238
        %s240 = sand.u32 %s104, 1
        %s241 = smul.addr %s240, 16
        %s242 = scalar_lea.vmem [#allocation8], %s241
        %v244 = vld [vmem:[%s202] sm:$0xff]
        %v245 = vld [vmem:[%s202 + $0x8] sm:$0xff]
        %v246 = vpack.c.bf16 %v245, %v244
        %v247 = vld [vmem:[#allocation7] sm:$0xff]
        %v248 = vld [vmem:[#allocation7 + $0x8] sm:$0xff]
        %v249 = vld [vmem:[#allocation7 + $0x10] sm:$0xff]
        %v250 = vld [vmem:[#allocation7 + $0x18] sm:$0xff]
        %v251 = vpack.c.bf16 %v248, %v247
        %v252 = vpack.c.bf16 %v250, %v249
        %vm253 = vcmask 261120
        %v255 = vsel %vm253, %v246, 0
        %257 = vmatprep.subr.bf16.mxu0 0
        %258 = vmatpush1.bf16.msra.mxu0 %v251
        %259 = vmatprep.subr.bf16.mxu0 0
        %260 = vmatpush1.bf16.msra.mxu0 %v252
        %261 = vmatprep.subr.bf16.mxu0 0
        %262 = vmatpush1.bf16.msra.mxu0 0
        %263 = vmatprep.subr.bf16.mxu0 0
        %264 = vmatpush1.bf16.msra.mxu0 0
        %265 = vmatprep.subr.bf16.mxu0 0
        %266 = vmatpush1.bf16.msra.mxu0 0
        %267 = vmatprep.subr.bf16.mxu0 0
        %268 = vmatpush1.bf16.msra.mxu0 0
        %269 = vmatprep.subr.bf16.mxu0 0
        %270 = vmatpush1.bf16.msra.mxu0 0
        %271 = vmatprep.subr.bf16.mxu0 0
        %272 = vmatpush1.bf16.msra.mxu0 0
        %273 = vmatprep.subr.bf16.mxu0 0
        %274 = vmatpush1.bf16.msra.mxu0 0
        %275 = vmatprep.subr.bf16.mxu0 0
        %276 = vmatpush1.bf16.msra.mxu0 0
        %277 = vmatprep.subr.bf16.mxu0 0
        %278 = vmatpush1.bf16.msra.mxu0 0
        %279 = vmatprep.subr.bf16.mxu0 0
        %280 = vmatpush1.bf16.msra.mxu0 0
        %281 = vmatprep.subr.bf16.mxu0 0
        %282 = vmatpush1.bf16.msra.mxu0 0
        %283 = vmatprep.subr.bf16.mxu0 0
        %284 = vmatpush1.bf16.msra.mxu0 0
        %285 = vmatprep.subr.bf16.mxu0 0
        %286 = vmatpush1.bf16.msra.mxu0 0
        %287 = vmatprep.subr.bf16.mxu0 0
        %288 = vmatpush1.bf16.msra.mxu0 0
        %289 = vmatprep.mubr.bf16.mxu0 0
        %290 = vmatmul.mubr.bf16.gmra.mrb[0].mxu0 %v255
        %v291 = vpop.f32.mrb[0].mxu0
        %v292 = vadd.f32 0.0, %v291
        %v293 = vpop.f32.mrb[0].mxu0
        %v294 = vpop.f32.mrb[0].mxu0
        %v295 = vadd.f32 0.0, %v294
        %v296 = vpop.f32.mrb[0].mxu0
        %297 = vdwg.mxu0
        %v298 = vmax.f32 %v292, 0.0
        %v299 = vmax.f32 %v295, 0.0
        %v300 = vld [vmem:[%s211] sm:$0xff]
        %v301 = vld [vmem:[%s211 + $0x8] sm:$0xff]
        %vm302 = vcmask 130048
        %v304 = vsel %vm302, %v300, 0
        %v307 = vsel %vm302, %v301, 0
        %309 = vmatprep.subr.mxu0 0.0
        %310 = vmatpush1.msra.mxu0 %v298
        %311 = vmatprep.subr.mxu0 0.0
        %312 = vmatpush1.msra.mxu0 %v299
        %313 = vmatprep.subr.mxu0 0.0
        %314 = vmatpush1.msra.mxu0 0.0
        %315 = vmatprep.subr.mxu0 0.0
        %316 = vmatpush1.msra.mxu0 0.0
        %317 = vmatprep.subr.mxu0 0.0
        %318 = vmatpush1.msra.mxu0 0.0
        %319 = vmatprep.subr.mxu0 0.0
        %320 = vmatpush1.msra.mxu0 0.0
        %321 = vmatprep.subr.mxu0 0.0
        %322 = vmatpush1.msra.mxu0 0.0
        %323 = vmatprep.subr.mxu0 0.0
        %324 = vmatpush1.msra.mxu0 0.0
        %325 = vmatprep.subr.mxu0 0.0
        %326 = vmatpush1.msra.mxu0 0.0
        %327 = vmatprep.subr.mxu0 0.0
        %328 = vmatpush1.msra.mxu0 0.0
        %329 = vmatprep.subr.mxu0 0.0
        %330 = vmatpush1.msra.mxu0 0.0
        %331 = vmatprep.subr.mxu0 0.0
        %332 = vmatpush1.msra.mxu0 0.0
        %333 = vmatprep.subr.mxu0 0.0
        %334 = vmatpush1.msra.mxu0 0.0
        %335 = vmatprep.subr.mxu0 0.0
        %336 = vmatpush1.msra.mxu0 0.0
        %337 = vmatprep.subr.mxu0 0.0
        %338 = vmatpush1.msra.mxu0 0.0
        %339 = vmatprep.subr.mxu0 0.0
        %340 = vmatpush1.msra.mxu0 0.0
        %341 = vmatprep.subr.mxu0 0.0
        %342 = vmatpush1.msra.mxu0 0.0
        %343 = vmatprep.subr.mxu0 0.0
        %344 = vmatpush1.msra.mxu0 0.0
        %345 = vmatprep.subr.mxu0 0.0
        %346 = vmatpush1.msra.mxu0 0.0
        %347 = vmatprep.subr.mxu0 0.0
        %348 = vmatpush1.msra.mxu0 0.0
        %349 = vmatprep.subr.mxu0 0.0
        %350 = vmatpush1.msra.mxu0 0.0
        %351 = vmatprep.subr.mxu0 0.0
        %352 = vmatpush1.msra.mxu0 0.0
        %353 = vmatprep.subr.mxu0 0.0
        %354 = vmatpush1.msra.mxu0 0.0
        %355 = vmatprep.subr.mxu0 0.0
        %356 = vmatpush1.msra.mxu0 0.0
        %357 = vmatprep.subr.mxu0 0.0
        %358 = vmatpush1.msra.mxu0 0.0
        %359 = vmatprep.subr.mxu0 0.0
        %360 = vmatpush1.msra.mxu0 0.0
        %361 = vmatprep.subr.mxu0 0.0
        %362 = vmatpush1.msra.mxu0 0.0
        %363 = vmatprep.subr.mxu0 0.0
        %364 = vmatpush1.msra.mxu0 0.0
        %365 = vmatprep.subr.mxu0 0.0
        %366 = vmatpush1.msra.mxu0 0.0
        %367 = vmatprep.subr.mxu0 0.0
        %368 = vmatpush1.msra.mxu0 0.0
        %369 = vmatprep.subr.mxu0 0.0
        %370 = vmatpush1.msra.mxu0 0.0
        %371 = vmatprep.subr.mxu0 0.0
        %372 = vmatpush1.msra.mxu0 0.0
        %373 = vmatprep.mubr.f32.mxu0 0.0
        %374 = vmatmul.mubr.f32.gmra.mrb[0].mxu0 %v304
        %v375 = vpop.f32.mrb[0].mxu0
        %v376 = vadd.f32 0.0, %v375
        %v377 = vpop.f32.mrb[0].mxu0
        %378 = vmatprep.mubr.f32.mxu0 0.0
        %379 = vmatmul.mubr.f32.gmra.mrb[0].mxu0 %v307
        %v380 = vpop.f32.mrb[0].mxu0
        %v381 = vadd.f32 0.0, %v380
        %v382 = vpop.f32.mrb[0].mxu0
        %383 = vdwg.mxu0
        %384 = vst.msk [vmem:[%s242] sm:$0xff] %vm253, %v376
        %385 = vst.msk [vmem:[%s242 + $0x8] sm:$0xff] %vm253, %v381
        %s386 = sand.u32 %s104, 1
        %s387 = scalar_lea.sflag [#allocation4], %s386
        %s388 = sand.u32 %s104, 1
        %s389 = smul.addr %s388, 16
        %s390 = scalar_lea.vmem [#allocation8], %s389
        // Predicated region
        $region45: #{tpu_custom_call.1} parent=31 // pred_check
          %p391 = pneg %p114
        $region46: #{tpu_custom_call.1} parent=31 // pred_check_branch
          %393 = sbr.rel (%p391) target = $region48
        $region47: #{tpu_custom_call.1} parent=31 // pred_region
          %s395 = ssub.s32 256, 256
          %396 = vsyncadd %s387, %s395
          %s397 = smul.addr %s23, 2
          %s398 = smul.addr %s397, 128
          %s399 = scalar_lea.hbm %s3, %s398
          %s400 = sshll.u32 %s390, 4
          %s401 = int_to_ptr.vmem [resolvable:$true] %s400
          %406 = dma.vmem_to_hbm [thread:$0]  %s401, 256, %s399, %s387, 128, 128, 8
        $region48: #{tpu_custom_call.1} parent=31 // pred_fallthru
          _
      $region32: #{tpu_custom_call.1} parent=5 // pred_fallthru
        _
      %p407 = scmp.le.s32.totalorder 2, %s18
      // Predicated region
      $region49: #{tpu_custom_call.1} parent=5 // pred_check
        %p408 = pneg %p407
      $region50: #{tpu_custom_call.1} parent=5 // pred_check_branch
        %410 = sbr.rel (%p408) target = $region52
      $region51: #{tpu_custom_call.1} parent=5 // pred_region
        %s411 = ssub.s32 %s18, 2
        // Predicated region
        $region53: #{tpu_custom_call.1} parent=51 // pred_check
          %p412 = pneg %p120
        $region54: #{tpu_custom_call.1} parent=51 // pred_check_branch
          %414 = sbr.rel (%p412) target = $region56
        $region55: #{tpu_custom_call.1} parent=51 // pred_region
          %s415 = sand.u32 %s105, 1
          %s416 = scalar_lea.sflag [#allocation4], %s415
          %s417 = sand.u32 %s105, 1
          %s418 = smul.addr %s417, 16
          %s419 = scalar_lea.vmem [#allocation8], %s418
          %420 = dma.done %s416, 256
        $region56: #{tpu_custom_call.1} parent=51 // pred_fallthru
          _
      $region52: #{tpu_custom_call.1} parent=5 // pred_fallthru
        _
    $region6: #{tpu_custom_call.1} parent=1 // loop_footer
      %s22 = sadd.s32 1, %s18
    $region7: #{tpu_custom_call.1} parent=1 // loop_footer_branch
      %17 = sbr.rel target = $region3
    $region8: #{tpu_custom_call.1} parent=1 // loop_exit
      _
    %421 = vsyncpa [#allocation3], 1
    %s422 = scalar_lea.sflag [#allocation3], 1
    %423 = vsyncpa %s422, 1
    %424 = vsyncpa [#allocation6], 1
    %s425 = scalar_lea.sflag [#allocation6], 1
    %426 = vsyncpa %s425, 1
    %427 = vsyncpa [#allocation4], 1
    %s428 = scalar_lea.sflag [#allocation4], 1
    %429 = vsyncpa %s428, 1

</llo_original>
